<compile_context>
chip_gen: v6e
topology: v6e:2x2x1
jax: 0.10.0
libtpu: 0.0.40
codegen_flags: <defaults>
</compile_context>

<pallas_src>
import jax
import jax.numpy as jnp
from jax.experimental import pallas as pl
from jax.experimental.pallas import tpu as pltpu


# ----------------------------------------------------------------------------
# Fused Pallas kernel: both projection heads on the MXU, one stacked output.
#   rows [0 : Mg)        -> graph head: xg @ wg + bg
#   rows [Mg : Mg + Mt)  -> text  head: xt @ wt + bt
# All operands are whole-array VMEM blocks (gridless call at these shapes).
# ----------------------------------------------------------------------------
def _fused_heads_kernel(xg_ref, wg_ref, bg_ref, xt_ref, wt_ref, bt_ref, o_ref):
    mg = xg_ref.shape[0]
    mt = xt_ref.shape[0]

    # Graph head (tiny K): single MXU matmul, f32 accumulation.
    og = jnp.dot(xg_ref[...], wg_ref[...], preferred_element_type=jnp.float32)
    og = og + bg_ref[...]

    # Text head: MXU matmul, f32 accumulation, bias in the epilogue.
    ot = jnp.dot(xt_ref[...], wt_ref[...], preferred_element_type=jnp.float32)
    ot = ot + bt_ref[...]

    # Single row-stacked output slab -> one writeback stream.
    o_ref[pl.ds(0, mg), :] = og.astype(o_ref.dtype)
    o_ref[pl.ds(mg, mt), :] = ot.astype(o_ref.dtype)


def fused_projections_pallas(xg, wg, bg, xt, wt, bt):
    """Both heads in one pallas_call; no wrapper-side pad/reshape plumbing.

    xg: [Mg, Kg], wg: [Kg, N], bg: [1, N]
    xt: [Mt, Kt], wt: [Kt, N], bt: [1, N]
    returns (graph_emb [Mg, N], text_emb [Mt, N])
    """
    Mg, Kg = xg.shape
    Mt, Kt = xt.shape
    N = wg.shape[1]
    assert wg.shape == (Kg, N) and bg.shape == (1, N)
    assert wt.shape == (Kt, N) and bt.shape == (1, N)

    flops = 2 * Mg * Kg * N + 2 * Mt * Kt * N
    bytes_accessed = 4 * (xg.size + wg.size + bg.size +
                          xt.size + wt.size + bt.size + (Mg + Mt) * N)

    vmem = pltpu.MemorySpace.VMEM
    stacked = pl.pallas_call(
        _fused_heads_kernel,
        out_shape=jax.ShapeDtypeStruct((Mg + Mt, N), xg.dtype),
        in_specs=[
            pl.BlockSpec(memory_space=vmem),   # xg  [Mg, Kg]
            pl.BlockSpec(memory_space=vmem),   # wg  [Kg, N]
            pl.BlockSpec(memory_space=vmem),   # bg  [1,  N]
            pl.BlockSpec(memory_space=vmem),   # xt  [Mt, Kt]
            pl.BlockSpec(memory_space=vmem),   # wt  [Kt, N]
            pl.BlockSpec(memory_space=vmem),   # bt  [1,  N]
        ],
        out_specs=pl.BlockSpec(memory_space=vmem),
        cost_estimate=pl.CostEstimate(
            flops=flops, transcendentals=0, bytes_accessed=bytes_accessed),
    )(xg, wg, bg, xt, wt, bt)

    # Per-head views of the stacked output (the only post-kernel ops).
    return stacked[:Mg], stacked[Mg:Mg + Mt]


# ----------------------------------------------------------------------------
# Faithful reproduction of the reference nn.Module
# ----------------------------------------------------------------------------
class Model:
    def __init__(self, model_name, num_node_features, nout, nhid,
                 graph_hidden_channels):
        # Reference sets both encoders to None.
        self.graph_encoder = None
        self.text_encoder = None
        # Deterministic parameters for the *implied* projection heads, used
        # only by the demo kernel path (the reference forward never touches
        # any parameters).
        key = jax.random.PRNGKey(0)
        k1, k2, k3, k4 = jax.random.split(key, 4)
        self._w_graph = jax.random.normal(
            k1, (num_node_features, nout), jnp.float32) * 0.02
        self._b_graph = jax.random.normal(k2, (1, nout), jnp.float32) * 0.02
        self._w_text = jax.random.normal(k3, (nhid, nout), jnp.float32) * 0.02
        self._b_text = jax.random.normal(k4, (1, nout), jnp.float32) * 0.02

    def forward(self, graph_batch, input_ids, attention_mask):
        # Exact semantics of the reference module: returns (None, None).
        # TODO(synk): reference encoders are None; no real compute to lower.
        return (None, None)

    def get_text_encoder(self):
        return self.text_encoder

    def get_graph_encoder(self):
        return self.graph_encoder

    # --- demo path exercising the Pallas kernel (not part of reference fwd) --
    def demo_projections(self, node_feats, text_hidden):
        return fused_projections_pallas(
            node_feats, self._w_graph, self._b_graph,
            text_hidden, self._w_text, self._b_text)


# ----------------------------------------------------------------------------
if __name__ == "__main__":
    num_node_features = 4
    nout = 32
    nhid = 32
    graph_hidden_channels = 16
    batch = 2
    num_nodes = 16
    seq = 8

    model = Model("synthetic", num_node_features, nout, nhid,
                  graph_hidden_channels)

    key = jax.random.PRNGKey(0)
    k_nodes, k_ids, k_hid = jax.random.split(key, 3)

    # graph_batch: node feature matrix [num_nodes, num_node_features]
    node_feats = jax.random.normal(k_nodes, (num_nodes, num_node_features),
                                   jnp.float32)
    input_ids = jax.random.randint(k_ids, (batch, seq), 0, 100, jnp.int32)
    attention_mask = jnp.ones((batch, seq), jnp.int32)

    # Faithful forward: must return (None, None) exactly like the reference.
    out = model.forward(node_feats, input_ids, attention_mask)
    assert out == (None, None)
    assert model.get_graph_encoder() is None
    assert model.get_text_encoder() is None

    # Exercise the fused Pallas kernel (implied projection heads).
    text_hidden = jax.random.normal(k_hid, (batch, nhid), jnp.float32)
    graph_emb, text_emb = model.demo_projections(node_feats, text_hidden)
    jax.block_until_ready(graph_emb)
    jax.block_until_ready(text_emb)

    # Sanity check against plain-JAX reference for the kernel.
    ref_g = node_feats @ model._w_graph + model._b_graph
    ref_t = text_hidden @ model._w_text + model._b_text
    assert graph_emb.shape == (num_nodes, nout)
    assert text_emb.shape == (batch, nout)
    assert jnp.allclose(graph_emb, ref_g, atol=1e-5)
    assert jnp.allclose(text_emb, ref_t, atol=1e-5)

    print("KERNEL_OK")
</pallas_src>

<mosaic_0001>
module attributes {stable_mosaic.version = 11 : i64} {
  func.func @_fused_heads_kernel(%arg0: memref<16x4xf32, #tpu.memory_space<vmem>>, %arg1: memref<4x32xf32, #tpu.memory_space<vmem>>, %arg2: memref<1x32xf32, #tpu.memory_space<vmem>>, %arg3: memref<2x32xf32, #tpu.memory_space<vmem>>, %arg4: memref<32x32xf32, #tpu.memory_space<vmem>>, %arg5: memref<1x32xf32, #tpu.memory_space<vmem>>, %arg6: memref<18x32xf32, #tpu.memory_space<vmem>>) attributes {dimension_semantics = [], scalar_prefetch = 0 : i64, scratch_operands = 0 : i64, tpu.core_type = #tpu.core_type<tc>} {
    %c0 = arith.constant 0 : index
    %c0_0 = arith.constant 0 : index
    %0 = vector.load %arg0[%c0, %c0_0] : memref<16x4xf32, #tpu.memory_space<vmem>>, vector<16x4xf32>
    %c0_1 = arith.constant 0 : index
    %c0_2 = arith.constant 0 : index
    %1 = vector.load %arg1[%c0_1, %c0_2] : memref<4x32xf32, #tpu.memory_space<vmem>>, vector<4x32xf32>
    %cst = arith.constant dense<0.000000e+00> : vector<16x32xf32>
    %2 = tpu.matmul %0, %1, %cst {dimension_numbers = #tpu.dot_dimension_numbers<[1], [0], [0], [1], [0, 0, 1, 1], [], []>} : vector<16x4xf32>, vector<4x32xf32>, vector<16x32xf32> -> vector<16x32xf32>
    %c0_3 = arith.constant 0 : index
    %c0_4 = arith.constant 0 : index
    %3 = vector.load %arg2[%c0_3, %c0_4] : memref<1x32xf32, #tpu.memory_space<vmem>>, vector<1x32xf32>
    %4 = vector.broadcast %3 : vector<1x32xf32> to vector<16x32xf32>
    %5 = arith.addf %2, %4 : vector<16x32xf32>
    %c0_5 = arith.constant 0 : index
    %c0_6 = arith.constant 0 : index
    %6 = vector.load %arg3[%c0_5, %c0_6] : memref<2x32xf32, #tpu.memory_space<vmem>>, vector<2x32xf32>
    %c0_7 = arith.constant 0 : index
    %c0_8 = arith.constant 0 : index
    %7 = vector.load %arg4[%c0_7, %c0_8] : memref<32x32xf32, #tpu.memory_space<vmem>>, vector<32x32xf32>
    %cst_9 = arith.constant dense<0.000000e+00> : vector<2x32xf32>
    %8 = tpu.matmul %6, %7, %cst_9 {dimension_numbers = #tpu.dot_dimension_numbers<[1], [0], [0], [1], [0, 0, 1, 1], [], []>} : vector<2x32xf32>, vector<32x32xf32>, vector<2x32xf32> -> vector<2x32xf32>
    %c0_10 = arith.constant 0 : index
    %c0_11 = arith.constant 0 : index
    %9 = vector.load %arg5[%c0_10, %c0_11] : memref<1x32xf32, #tpu.memory_space<vmem>>, vector<1x32xf32>
    %10 = vector.broadcast %9 : vector<1x32xf32> to vector<2x32xf32>
    %11 = arith.addf %8, %10 : vector<2x32xf32>
    %c0_12 = arith.constant 0 : index
    %c0_13 = arith.constant 0 : index
    %12 = vector.load %arg6[%c0_12, %c0_13] : memref<18x32xf32, #tpu.memory_space<vmem>>, vector<16x32xf32>
    tpu.vector_store %arg6[%c0_12, %c0_13], %5 {strides = array<i32>} : memref<18x32xf32, #tpu.memory_space<vmem>>, vector<16x32xf32>,
    %c16 = arith.constant 16 : index
    %c0_14 = arith.constant 0 : index
    %13 = vector.load %arg6[%c16, %c0_14] : memref<18x32xf32, #tpu.memory_space<vmem>>, vector<2x32xf32>
    tpu.vector_store %arg6[%c16, %c0_14], %11 {strides = array<i32>} : memref<18x32xf32, #tpu.memory_space<vmem>>, vector<2x32xf32>,
    return
  }
}

</mosaic_0001>

<llo_original>
// kernel: tpu_custom_call.1
$region0: #{tpu_custom_call.1}
  #allocation0 [shape = 'u32[]', space=smem, size = 0x4, offset = 0x4, fixed_abs, tag = 'smem constant byte address 0x4 - core index']
  #allocation1 [shape = 'u32[144,128]{1,0:T(1,128)}', space=vmem, size = 0x12000, scoped, tag = 'internal scratch']
  %s0 = inlined_call_operand.vmem [shape: f32[16,4], index: 0, kind: input, shape index: {}]
  %s1 = inlined_call_operand.vmem [shape: f32[4,32], index: 1, kind: input, shape index: {}]
  %s2 = inlined_call_operand.vmem [shape: f32[1,32], index: 2, kind: input, shape index: {}]
  %s3 = inlined_call_operand.vmem [shape: f32[2,32], index: 3, kind: input, shape index: {}]
  %s4 = inlined_call_operand.hbm [shape: f32[32,32], index: 4, kind: input, shape index: {}]
  %s5 = inlined_call_operand.vmem [shape: f32[1,32], index: 5, kind: input, shape index: {}]
  %s6 = inlined_call_operand.hbm [shape: f32[18,32], index: 6, kind: output, shape index: {}]
  %s7 = sld [smem:[#allocation0]]
  $region38: #{tpu_custom_call.1} parent=0
    _
  %s9 = ssub.s32 1, %s7
  %s10 = scalar_select 0, %s9, %s7
  $region1: #{tpu_custom_call.1} parent=0
    #allocation2 [shape = 'u8[16384]{0}', space=vmem, size = 0x4000, scoped, tag = 'input window, operand 4, single buffered']
    #allocation3 [shape = 's32[1]{0}', space=sflag, size = 0x4, scoped, tag = 'scoped memory for tpu_custom_call.1']
    #allocation4 [shape = 's32[1]{0}', space=sflag, size = 0x4, scoped, tag = 'scoped memory for tpu_custom_call.1']
    #allocation5 [shape = 'u8[12288]{0}', space=vmem, size = 0x3000, scoped, tag = 'output window, operand 0, single buffered']
    %11 = vsyncpa [#allocation3], 0
    %12 = vsyncpa [#allocation4], 0
    // Predicated region
    $region2: #{tpu_custom_call.1} parent=1 // pred_check
      _
    $region3: #{tpu_custom_call.1} parent=1 // pred_check_branch
      %14 = sbr.rel (0) target = $region5
    $region4: #{tpu_custom_call.1} parent=1 // pred_region
      _
    $region5: #{tpu_custom_call.1} parent=1 // pred_fallthru
      _
    // Predicated region
    $region6: #{tpu_custom_call.1} parent=1 // pred_check
      _
    $region7: #{tpu_custom_call.1} parent=1 // pred_check_branch
      %16 = sbr.rel (0) target = $region9
    $region8: #{tpu_custom_call.1} parent=1 // pred_region
      _
    $region9: #{tpu_custom_call.1} parent=1 // pred_fallthru
      _
    // Predicated region
    $region10: #{tpu_custom_call.1} parent=1 // pred_check
      _
    $region11: #{tpu_custom_call.1} parent=1 // pred_check_branch
      %18 = sbr.rel (0) target = $region13
    $region12: #{tpu_custom_call.1} parent=1 // pred_region
      _
    $region13: #{tpu_custom_call.1} parent=1 // pred_fallthru
      _
    // Predicated region
    $region14: #{tpu_custom_call.1} parent=1 // pred_check
      _
    $region15: #{tpu_custom_call.1} parent=1 // pred_check_branch
      %20 = sbr.rel (0) target = $region17
    $region16: #{tpu_custom_call.1} parent=1 // pred_region
      _
    $region17: #{tpu_custom_call.1} parent=1 // pred_fallthru
      _
    // Predicated region
    $region18: #{tpu_custom_call.1} parent=1 // pred_check
      _
    $region19: #{tpu_custom_call.1} parent=1 // pred_check_branch
      %22 = sbr.rel (0) target = $region21
    $region20: #{tpu_custom_call.1} parent=1 // pred_region
      %s24 = ssub.s32 512, 512
      %25 = vsyncadd [#allocation3], %s24
      %s26 = sshll.u32 [#allocation2], 4
      %s27 = int_to_ptr.vmem [resolvable:$true] %s26
      %32 = dma.hbm_to_vmem [thread:$0]  %s4, 512, %s27, [#allocation3], 128, 128, 8
    $region21: #{tpu_custom_call.1} parent=1 // pred_fallthru
      _
    // Predicated region
    $region22: #{tpu_custom_call.1} parent=1 // pred_check
      _
    $region23: #{tpu_custom_call.1} parent=1 // pred_check_branch
      %34 = sbr.rel (0) target = $region25
    $region24: #{tpu_custom_call.1} parent=1 // pred_region
      _
    $region25: #{tpu_custom_call.1} parent=1 // pred_fallthru
      _
    // Predicated region
    $region26: #{tpu_custom_call.1} parent=1 // pred_check
      _
    $region27: #{tpu_custom_call.1} parent=1 // pred_check_branch
      %36 = sbr.rel (0) target = $region29
    $region28: #{tpu_custom_call.1} parent=1 // pred_region
      %37 = dma.done [#allocation3], 512
    $region29: #{tpu_custom_call.1} parent=1 // pred_fallthru
      _
    %v38 = vld [vmem:[%s0] sm:$0xff]
    %v39 = vld [vmem:[%s0 + $0x8] sm:$0xff]
    %v40 = vld [vmem:[%s1] sm:$0xf]
    %v41 = vld [vmem:[%s2] sm:$0x1]
    %v43 = vlaneseq
    %v44 = vshrl.u32 %v43, 7
    %v45 = vsub.s32 0, %v44
    %v46 = vrot.slane %v41, %v45
    %vm48 = vcmask 31744
    %v50 = vsel %vm48, %v38, 0
    %v53 = vsel %vm48, %v39, 0
    %vm55 = vcmask 1043456
    %v57 = vsel %vm55, %v40, 0
    %59 = vmatprep.subr.mxu0 0.0
    %60 = vmatpush1.msra.mxu0 0.0
    %61 = vmatprep.subr.mxu0 0.0
    %62 = vmatpush1.msra.mxu0 0.0
    %63 = vmatprep.subr.mxu0 0.0
    %64 = vmatpush1.msra.mxu0 0.0
    %65 = vmatprep.subr.mxu0 0.0
    %66 = vmatpush1.msra.mxu0 0.0
    %67 = vmatprep.subr.mxu0 0.0
    %68 = vmatpush1.msra.mxu0 0.0
    %69 = vmatprep.subr.mxu0 0.0
    %70 = vmatpush1.msra.mxu0 0.0
    %71 = vmatprep.subr.mxu0 0.0
    %72 = vmatpush1.msra.mxu0 0.0
    %73 = vmatprep.subr.mxu0 0.0
    %74 = vmatpush1.msra.mxu0 0.0
    %75 = vmatprep.subr.mxu0 0.0
    %76 = vmatpush1.msra.mxu0 0.0
    %77 = vmatprep.subr.mxu0 0.0
    %78 = vmatpush1.msra.mxu0 0.0
    %79 = vmatprep.subr.mxu0 0.0
    %80 = vmatpush1.msra.mxu0 0.0
    %81 = vmatprep.subr.mxu0 0.0
    %82 = vmatpush1.msra.mxu0 0.0
    %83 = vmatprep.subr.mxu0 0.0
    %84 = vmatpush1.msra.mxu0 0.0
    %85 = vmatprep.subr.mxu0 0.0
    %86 = vmatpush1.msra.mxu0 0.0
    %87 = vmatprep.subr.mxu0 0.0
    %88 = vmatpush1.msra.mxu0 0.0
    %89 = vmatprep.subr.mxu0 0.0
    %90 = vmatpush1.msra.mxu0 %v57
    %91 = vmatprep.subr.mxu0 0.0
    %92 = vmatpush2.msra.mxu0 0.0
    %93 = vmatprep.subr.mxu0 0.0
    %94 = vmatpush2.msra.mxu0 0.0
    %95 = vmatprep.subr.mxu0 0.0
    %96 = vmatpush2.msra.mxu0 0.0
    %97 = vmatprep.subr.mxu0 0.0
    %98 = vmatpush2.msra.mxu0 0.0
    %99 = vmatprep.subr.mxu0 0.0
    %100 = vmatpush2.msra.mxu0 0.0
    %101 = vmatprep.subr.mxu0 0.0
    %102 = vmatpush2.msra.mxu0 0.0
    %103 = vmatprep.subr.mxu0 0.0
    %104 = vmatpush2.msra.mxu0 0.0
    %105 = vmatprep.subr.mxu0 0.0
    %106 = vmatpush2.msra.mxu0 0.0
    %107 = vmatprep.subr.mxu0 0.0
    %108 = vmatpush2.msra.mxu0 0.0
    %109 = vmatprep.subr.mxu0 0.0
    %110 = vmatpush2.msra.mxu0 0.0
    %111 = vmatprep.subr.mxu0 0.0
    %112 = vmatpush2.msra.mxu0 0.0
    %113 = vmatprep.subr.mxu0 0.0
    %114 = vmatpush2.msra.mxu0 0.0
    %115 = vmatprep.subr.mxu0 0.0
    %116 = vmatpush2.msra.mxu0 0.0
    %117 = vmatprep.subr.mxu0 0.0
    %118 = vmatpush2.msra.mxu0 0.0
    %119 = vmatprep.subr.mxu0 0.0
    %120 = vmatpush2.msra.mxu0 0.0
    %121 = vmatprep.subr.mxu0 0.0
    %122 = vmatpush2.msra.mxu0 0.0
    %123 = vmatprep.mubr.f32.mxu0 0.0
    %124 = vmatmul.mubr.f32.gmra.mxu0 %v50
    %v125 = vpop.f32.mrf.mxu0
    %v126 = vadd.f32 %v46, %v125
    %v127 = vpop.f32.mrf.mxu0
    %128 = vmatprep.mubr.f32.mxu0 0.0
    %129 = vmatmul.mubr.f32.gmra.mxu0 %v53
    %v130 = vpop.f32.mrf.mxu0
    %v131 = vadd.f32 %v46, %v130
    %v132 = vpop.f32.mrf.mxu0
    %133 = vdwg.mxu0
    %v134 = vld [vmem:[%s3] sm:$0x3]
    %v135 = vld [vmem:[#allocation2] sm:$0xff]
    %v136 = vld [vmem:[#allocation2 + $0x8] sm:$0xff]
    %v137 = vld [vmem:[#allocation2 + $0x10] sm:$0xff]
    %v138 = vld [vmem:[#allocation2 + $0x18] sm:$0xff]
    %v139 = vld [vmem:[%s5] sm:$0x1]
    %v141 = vlaneseq
    %v142 = vshrl.u32 %v141, 7
    %v143 = vsub.s32 0, %v142
    %v144 = vrot.slane %v139, %v143
    %vm146 = vcmask 261120
    %v148 = vsel %vm146, %v134, 0
    %150 = vmatprep.subr.mxu0 0.0
    %151 = vmatpush1.msra.mxu0 0.0
    %152 = vmatprep.subr.mxu0 0.0
    %153 = vmatpush1.msra.mxu0 0.0
    %154 = vmatprep.subr.mxu0 0.0
    %155 = vmatpush1.msra.mxu0 0.0
    %156 = vmatprep.subr.mxu0 0.0
    %157 = vmatpush1.msra.mxu0 0.0
    %158 = vmatprep.subr.mxu0 0.0
    %159 = vmatpush1.msra.mxu0 0.0
    %160 = vmatprep.subr.mxu0 0.0
    %161 = vmatpush1.msra.mxu0 0.0
    %162 = vmatprep.subr.mxu0 0.0
    %163 = vmatpush1.msra.mxu0 0.0
    %164 = vmatprep.subr.mxu0 0.0
    %165 = vmatpush1.msra.mxu0 0.0
    %166 = vmatprep.subr.mxu0 0.0
    %167 = vmatpush1.msra.mxu0 0.0
    %168 = vmatprep.subr.mxu0 0.0
    %169 = vmatpush1.msra.mxu0 0.0
    %170 = vmatprep.subr.mxu0 0.0
    %171 = vmatpush1.msra.mxu0 0.0
    %172 = vmatprep.subr.mxu0 0.0
    %173 = vmatpush1.msra.mxu0 0.0
    %174 = vmatprep.subr.mxu0 0.0
    %175 = vmatpush1.msra.mxu0 %v138
    %176 = vmatprep.subr.mxu0 0.0
    %177 = vmatpush1.msra.mxu0 %v137
    %178 = vmatprep.subr.mxu0 0.0
    %179 = vmatpush1.msra.mxu0 %v136
    %180 = vmatprep.subr.mxu0 0.0
    %181 = vmatpush1.msra.mxu0 %v135
    %182 = vmatprep.subr.mxu0 0.0
    %183 = vmatpush2.msra.mxu0 0.0
    %184 = vmatprep.subr.mxu0 0.0
    %185 = vmatpush2.msra.mxu0 0.0
    %186 = vmatprep.subr.mxu0 0.0
    %187 = vmatpush2.msra.mxu0 0.0
    %188 = vmatprep.subr.mxu0 0.0
    %189 = vmatpush2.msra.mxu0 0.0
    %190 = vmatprep.subr.mxu0 0.0
    %191 = vmatpush2.msra.mxu0 0.0
    %192 = vmatprep.subr.mxu0 0.0
    %193 = vmatpush2.msra.mxu0 0.0
    %194 = vmatprep.subr.mxu0 0.0
    %195 = vmatpush2.msra.mxu0 0.0
    %196 = vmatprep.subr.mxu0 0.0
    %197 = vmatpush2.msra.mxu0 0.0
    %198 = vmatprep.subr.mxu0 0.0
    %199 = vmatpush2.msra.mxu0 0.0
    %200 = vmatprep.subr.mxu0 0.0
    %201 = vmatpush2.msra.mxu0 0.0
    %202 = vmatprep.subr.mxu0 0.0
    %203 = vmatpush2.msra.mxu0 0.0
    %204 = vmatprep.subr.mxu0 0.0
    %205 = vmatpush2.msra.mxu0 0.0
    %206 = vmatprep.subr.mxu0 0.0
    %207 = vmatpush2.msra.mxu0 0.0
    %208 = vmatprep.subr.mxu0 0.0
    %209 = vmatpush2.msra.mxu0 0.0
    %210 = vmatprep.subr.mxu0 0.0
    %211 = vmatpush2.msra.mxu0 0.0
    %212 = vmatprep.subr.mxu0 0.0
    %213 = vmatpush2.msra.mxu0 0.0
    %214 = vmatprep.mubr.f32.mxu0 0.0
    %215 = vmatmul.mubr.f32.gmra.mxu0 %v148
    %v216 = vpop.f32.mrf.mxu0
    %v217 = vadd.f32 %v144, %v216
    %v218 = vpop.f32.mrf.mxu0
    %219 = vdwg.mxu0
    %220 = vst.msk [vmem:[#allocation5] sm:$0xff] %vm146, %v126
    %221 = vst.msk [vmem:[#allocation5 + $0x8] sm:$0xff] %vm146, %v131
    %vm222 = vcmask 254976
    %223 = vst.msk [vmem:[#allocation5 + $0x10] sm:$0x3] %vm222, %v217
    // Predicated region
    $region30: #{tpu_custom_call.1} parent=1 // pred_check
      _
    $region31: #{tpu_custom_call.1} parent=1 // pred_check_branch
      %225 = sbr.rel (0) target = $region33
    $region32: #{tpu_custom_call.1} parent=1 // pred_region
      %s227 = ssub.s32 384, 384
      %228 = vsyncadd [#allocation4], %s227
      %s229 = sshll.u32 [#allocation5], 4
      %s230 = int_to_ptr.vmem [resolvable:$true] %s229
      %235 = dma.vmem_to_hbm [thread:$0]  %s230, 384, %s6, [#allocation4], 128, 128, 8
    $region33: #{tpu_custom_call.1} parent=1 // pred_fallthru
      _
    // Predicated region
    $region34: #{tpu_custom_call.1} parent=1 // pred_check
      _
    $region35: #{tpu_custom_call.1} parent=1 // pred_check_branch
      %237 = sbr.rel (0) target = $region37
    $region36: #{tpu_custom_call.1} parent=1 // pred_region
      %238 = dma.done [#allocation4], 384
    $region37: #{tpu_custom_call.1} parent=1 // pred_fallthru
      _
    %239 = vsyncpa [#allocation3], 1
    %240 = vsyncpa [#allocation4], 1

</llo_original>
